<compile_context>
chip_gen: v7x
topology: tpu7x:2x2x1
jax: 0.10.0
libtpu: 0.0.40
codegen_flags: <defaults>
</compile_context>

<pallas_src>
import jax
import jax.numpy as jnp
from jax.experimental import pallas as pl
from jax.experimental.pallas import tpu as pltpu


def _round_up(x, m):
    return (x + m - 1) // m * m


def fused_embed_mlp_softmax_kernel(text_ref, r_ref, jmod_ref,
                                   w1e_ref, b1_ref, w2_ref, b2_ref, o_ref):
    """One batch tile.

    text : (TB, S)    int32 token ids
    r    : (S, S*V)   f32   lane-expansion matrix, R[s, s*V:(s+1)*V] = 1
    jmod : (1, S*V)   f32   constant row, jmod[j] = j % V
    w1e  : (S*V, Hp)  bf16  fused (embedding @ fc1) table
    b1   : (1, Hp)    f32
    w2   : (Hp, Op)   bf16  fc2 weight (zero-padded; padded logit cols get -1e30 bias)
    b2   : (1, Op)    f32
    o    : (TB, Op)   f32   softmax probabilities (padded columns ~ 0)
    """
    # Expand tokens along the fused (position, vocab) lane axis with one tiny MXU
    # matmul, then build the one-hot with a single full-width compare.
    tokens_f = text_ref[...].astype(jnp.float32)                       # (TB, S), exact ints
    tok_expand = jnp.dot(tokens_f, r_ref[...],
                         preferred_element_type=jnp.float32)           # (TB, S*V), tok_expand[b,j]=tokens[b, j//V]
    onehot = (tok_expand == jmod_ref[...]).astype(jnp.bfloat16)        # (TB, S*V)

    # Embedding gather + fc1 as a single MXU matmul (K = S*V, N = Hp lane-dense).
    h = jnp.dot(onehot, w1e_ref[...], preferred_element_type=jnp.float32) + b1_ref[...]
    h = jnp.maximum(h, 0.0)                                            # ReLU; dropout = identity (eval)

    # fc2 (N = Op lane-dense thanks to padding).
    logits = jnp.dot(h.astype(jnp.bfloat16), w2_ref[...],
                     preferred_element_type=jnp.float32) + b2_ref[...]

    # Row softmax; padded columns carry a -1e30 bias -> exp underflows to exactly 0.
    m = jnp.max(logits, axis=1, keepdims=True)
    e = jnp.exp(logits - m)
    denom = jnp.sum(e, axis=1, keepdims=True)
    o_ref[...] = e * pl.reciprocal(denom, approx=True)


def prepare_params(emb_w, fc1_w, fc1_b, fc2_w, fc2_b):
    """One-time weight preparation (call at weight-load time, not per forward).

    Folds the embedding into fc1:  T[s*V+v, :] = emb_w[v] @ W1[s*E:(s+1)*E, :],
    pads H/O to 128 lanes, and builds the lane-expansion constants for the kernel.
    """
    V, E = emb_w.shape
    H, F = fc1_w.shape          # PyTorch Linear weight is (out, in)
    O = fc2_w.shape[0]
    S = F // E                  # sequence length = 2 * max_length
    Hp = _round_up(H, 128)
    Op = _round_up(O, 128)
    SV = S * V

    w1 = fc1_w.T.reshape(S, E, H).astype(jnp.float32)
    w1eff = jnp.einsum("ve,seh->svh", emb_w.astype(jnp.float32), w1).reshape(SV, H)
    w1eff = jnp.pad(w1eff, ((0, 0), (0, Hp - H))).astype(jnp.bfloat16)
    b1p = jnp.pad(fc1_b.astype(jnp.float32), (0, Hp - H)).reshape(1, Hp)
    w2p = jnp.pad(fc2_w.T.astype(jnp.float32),
                  ((0, Hp - H), (0, Op - O))).astype(jnp.bfloat16)
    b2p = jnp.pad(fc2_b.astype(jnp.float32), (0, Op - O),
                  constant_values=-1e30).reshape(1, Op)

    # Lane-expansion constants for the in-kernel one-hot compare.
    col = jnp.arange(SV)
    r_expand = (col[None, :] // V == jnp.arange(S)[:, None]).astype(jnp.float32)  # (S, SV)
    jmod = (col % V).astype(jnp.float32).reshape(1, SV)                           # (1, SV)

    # TODO(synk): token ids outside [0, V) silently map to an all-zero embedding
    # instead of erroring like nn.Embedding; clamp/validate upstream if needed.
    return {
        "r": r_expand, "jmod": jmod,
        "w1": w1eff, "b1": b1p, "w2": w2p, "b2": b2p,
        "out_dim": O,
    }


def neural_network_forward(text, params, *, tb_max=256):
    """text: (B, 2*max_length) int.  Returns (B, output_dim) f32 softmax probs."""
    text = text.astype(jnp.int32)
    B, S = text.shape
    SV, Hp = params["w1"].shape
    Op = params["w2"].shape[1]
    O = params["out_dim"]

    # Batch tiling: split into >= 2 tiles whenever the batch allows so both of
    # v7x's TensorCores get grid work; rows per tile are a multiple of 8.
    TB = min(tb_max, max(8, _round_up((B + 1) // 2, 8)))
    Bp = _round_up(B, TB)
    text_p = jnp.pad(text, ((0, Bp - B), (0, 0)))       # padded rows use token 0

    cost = pl.CostEstimate(
        flops=2 * Bp * (S * SV + SV * Hp + Hp * Op),
        transcendentals=Bp * (Op + 1),
        bytes_accessed=(text_p.size * 4
                        + params["r"].size * 4 + params["jmod"].size * 4
                        + params["w1"].size * 2 + params["w2"].size * 2
                        + params["b1"].size * 4 + params["b2"].size * 4
                        + Bp * Op * 4),
    )

    out_p = pl.pallas_call(
        fused_embed_mlp_softmax_kernel,
        out_shape=jax.ShapeDtypeStruct((Bp, Op), jnp.float32),
        grid=(Bp // TB,),
        in_specs=[
            pl.BlockSpec((TB, S), lambda i: (i, 0)),        # token ids, tiled over batch
            pl.BlockSpec((S, SV), lambda i: (0, 0)),        # resident constants / weights
            pl.BlockSpec((1, SV), lambda i: (0, 0)),
            pl.BlockSpec((SV, Hp), lambda i: (0, 0)),
            pl.BlockSpec((1, Hp), lambda i: (0, 0)),
            pl.BlockSpec((Hp, Op), lambda i: (0, 0)),
            pl.BlockSpec((1, Op), lambda i: (0, 0)),
        ],
        out_specs=pl.BlockSpec((TB, Op), lambda i: (i, 0)),
        compiler_params=pltpu.CompilerParams(
            dimension_semantics=("parallel",),              # shard batch tiles across TCs
        ),
        cost_estimate=cost,
    )(text_p, params["r"], params["jmod"],
      params["w1"], params["b1"], params["w2"], params["b2"])

    return out_p[:B, :O]


if __name__ == "__main__":
    # Small, deterministic config consistent with the module's __init__.
    vocab_size = 32
    embedding_dim = 8
    max_length = 8            # text has seq_len = 2 * max_length = 16
    hidden_dim = 32
    output_dim = 4
    batch = 2
    seq_len = 2 * max_length
    flat_dim = seq_len * embedding_dim   # 128

    key = jax.random.PRNGKey(0)
    k_emb, k_w1, k_b1, k_w2, k_b2, k_txt = jax.random.split(key, 6)

    # Embedding weights; padding_idx=0 -> row 0 is zero.
    emb_w = jax.random.normal(k_emb, (vocab_size, embedding_dim), dtype=jnp.float32)
    emb_w = emb_w.at[0].set(0.0)

    # Linear layers (PyTorch convention: weight (out, in), bias (out,)).
    fc1_w = jax.random.normal(k_w1, (hidden_dim, flat_dim), dtype=jnp.float32) * 0.05
    fc1_b = jax.random.normal(k_b1, (hidden_dim,), dtype=jnp.float32) * 0.05
    fc2_w = jax.random.normal(k_w2, (output_dim, hidden_dim), dtype=jnp.float32) * 0.05
    fc2_b = jax.random.normal(k_b2, (output_dim,), dtype=jnp.float32) * 0.05

    # Integer token ids, include some padding (0) tokens.
    text = jax.random.randint(k_txt, (batch, seq_len), 0, vocab_size, dtype=jnp.int32)

    # One-time weight prep (hoisted out of the per-call forward path).
    params = prepare_params(emb_w, fc1_w, fc1_b, fc2_w, fc2_b)

    probs = neural_network_forward(text, params)
    probs = jax.block_until_ready(probs)

    # Pure-JAX f32 reference of the same forward pass (bf16 matmul operands in the
    # kernel -> tolerance loosened accordingly).
    embedded = jnp.take(emb_w, text, axis=0).reshape(batch, -1)
    h = jnp.maximum(embedded @ fc1_w.T + fc1_b, 0.0)
    logits = h @ fc2_w.T + fc2_b
    ref = jax.nn.softmax(logits, axis=1)

    assert probs.shape == (batch, output_dim)
    assert jnp.allclose(probs, ref, atol=2e-2, rtol=0), "mismatch vs reference"
    assert jnp.allclose(jnp.sum(probs, axis=1), 1.0, atol=5e-3)

    print("KERNEL_OK")
</pallas_src>

<mosaic_0001>
module attributes {stable_mosaic.version = 11 : i64} {
  func.func @fused_embed_mlp_softmax_kernel(%arg0: i32, %arg1: memref<8x16xi32, #tpu.memory_space<vmem>>, %arg2: memref<16x512xf32, #tpu.memory_space<vmem>>, %arg3: memref<1x512xf32, #tpu.memory_space<vmem>>, %arg4: memref<512x128xbf16, #tpu.memory_space<vmem>>, %arg5: memref<1x128xf32, #tpu.memory_space<vmem>>, %arg6: memref<128x128xbf16, #tpu.memory_space<vmem>>, %arg7: memref<1x128xf32, #tpu.memory_space<vmem>>, %arg8: memref<8x128xf32, #tpu.memory_space<vmem>>) attributes {dimension_semantics = [#tpu.dimension_semantics<parallel>], iteration_bounds = array<i64: 1>, scalar_prefetch = 0 : i64, scratch_operands = 0 : i64, tpu.core_type = #tpu.core_type<tc>, window_params = [{transform_indices = @transform_0, window_bounds = array<i64: 8, 16>}, {pipeline_mode = #tpu.pipeline_mode<synchronous>, transform_indices = @transform_1, window_bounds = array<i64: 16, 512>}, {pipeline_mode = #tpu.pipeline_mode<synchronous>, transform_indices = @transform_2, window_bounds = array<i64: 1, 512>}, {pipeline_mode = #tpu.pipeline_mode<synchronous>, transform_indices = @transform_3, window_bounds = array<i64: 512, 128>}, {pipeline_mode = #tpu.pipeline_mode<synchronous>, transform_indices = @transform_4, window_bounds = array<i64: 1, 128>}, {pipeline_mode = #tpu.pipeline_mode<synchronous>, transform_indices = @transform_5, window_bounds = array<i64: 128, 128>}, {pipeline_mode = #tpu.pipeline_mode<synchronous>, transform_indices = @transform_6, window_bounds = array<i64: 1, 128>}, {transform_indices = @transform_7, window_bounds = array<i64: 8, 128>}]} {
    %c0 = arith.constant 0 : index
    %c0_0 = arith.constant 0 : index
    %0 = vector.load %arg1[%c0, %c0_0] : memref<8x16xi32, #tpu.memory_space<vmem>>, vector<8x16xi32>
    %1 = arith.sitofp %0 : vector<8x16xi32> to vector<8x16xf32>
    %c0_1 = arith.constant 0 : index
    %c0_2 = arith.constant 0 : index
    %2 = vector.load %arg2[%c0_1, %c0_2] : memref<16x512xf32, #tpu.memory_space<vmem>>, vector<16x512xf32>
    %cst = arith.constant dense<0.000000e+00> : vector<8x512xf32>
    %3 = tpu.matmul %1, %2, %cst {dimension_numbers = #tpu.dot_dimension_numbers<[1], [0], [0], [1], [0, 0, 1, 1], [], []>} : vector<8x16xf32>, vector<16x512xf32>, vector<8x512xf32> -> vector<8x512xf32>
    %c0_3 = arith.constant 0 : index
    %c0_4 = arith.constant 0 : index
    %4 = vector.load %arg3[%c0_3, %c0_4] : memref<1x512xf32, #tpu.memory_space<vmem>>, vector<1x512xf32>
    %5 = vector.broadcast %4 : vector<1x512xf32> to vector<8x512xf32>
    %6 = arith.cmpf oeq, %3, %5 : vector<8x512xf32>
    %7 = arith.extui %6 : vector<8x512xi1> to vector<8x512xi32>
    %8 = arith.sitofp %7 : vector<8x512xi32> to vector<8x512xf32>
    %9 = arith.truncf %8 : vector<8x512xf32> to vector<8x512xbf16>
    %c0_5 = arith.constant 0 : index
    %c0_6 = arith.constant 0 : index
    %10 = vector.load %arg4[%c0_5, %c0_6] : memref<512x128xbf16, #tpu.memory_space<vmem>>, vector<512x128xbf16>
    %cst_7 = arith.constant dense<0.000000e+00> : vector<8x128xf32>
    %11 = tpu.matmul %9, %10, %cst_7 {dimension_numbers = #tpu.dot_dimension_numbers<[1], [0], [0], [1], [0, 0, 1, 1], [], []>} : vector<8x512xbf16>, vector<512x128xbf16>, vector<8x128xf32> -> vector<8x128xf32>
    %c0_8 = arith.constant 0 : index
    %c0_9 = arith.constant 0 : index
    %12 = vector.load %arg5[%c0_8, %c0_9] : memref<1x128xf32, #tpu.memory_space<vmem>>, vector<1x128xf32>
    %13 = vector.broadcast %12 : vector<1x128xf32> to vector<8x128xf32>
    %14 = arith.addf %11, %13 : vector<8x128xf32>
    %cst_10 = arith.constant 0.000000e+00 : f32
    %15 = vector.broadcast %cst_10 : f32 to vector<8x128xf32>
    %16 = arith.maximumf %14, %15 : vector<8x128xf32>
    %17 = arith.truncf %16 : vector<8x128xf32> to vector<8x128xbf16>
    %c0_11 = arith.constant 0 : index
    %c0_12 = arith.constant 0 : index
    %18 = vector.load %arg6[%c0_11, %c0_12] : memref<128x128xbf16, #tpu.memory_space<vmem>>, vector<128x128xbf16>
    %cst_13 = arith.constant dense<0.000000e+00> : vector<8x128xf32>
    %19 = tpu.matmul %17, %18, %cst_13 {dimension_numbers = #tpu.dot_dimension_numbers<[1], [0], [0], [1], [0, 0, 1, 1], [], []>} : vector<8x128xbf16>, vector<128x128xbf16>, vector<8x128xf32> -> vector<8x128xf32>
    %c0_14 = arith.constant 0 : index
    %c0_15 = arith.constant 0 : index
    %20 = vector.load %arg7[%c0_14, %c0_15] : memref<1x128xf32, #tpu.memory_space<vmem>>, vector<1x128xf32>
    %21 = vector.broadcast %20 : vector<1x128xf32> to vector<8x128xf32>
    %22 = arith.addf %19, %21 : vector<8x128xf32>
    %cst_16 = arith.constant dense<0xFF800000> : vector<8xf32>
    %23 = vector.multi_reduction <maximumf>, %22, %cst_16 [1] : vector<8x128xf32> to vector<8xf32>
    %24 = vector.shape_cast %23 : vector<8xf32> to vector<8x1xf32>
    %25 = vector.broadcast %24 : vector<8x1xf32> to vector<8x128xf32>
    %26 = arith.subf %22, %25 : vector<8x128xf32>
    %27 = math.exp %26 : vector<8x128xf32>
    %cst_17 = arith.constant dense<0.000000e+00> : vector<8xf32>
    %28 = vector.multi_reduction <add>, %27, %cst_17 [1] : vector<8x128xf32> to vector<8xf32>
    %29 = vector.shape_cast %28 : vector<8xf32> to vector<8x1xf32>
    %30 = tpu.reciprocal %29 {approx = true} : vector<8x1xf32> -> vector<8x1xf32>
    %31 = vector.broadcast %30 : vector<8x1xf32> to vector<8x128xf32>
    %32 = arith.mulf %27, %31 : vector<8x128xf32>
    %c0_18 = arith.constant 0 : index
    %c0_19 = arith.constant 0 : index
    %33 = vector.load %arg8[%c0_18, %c0_19] : memref<8x128xf32, #tpu.memory_space<vmem>>, vector<8x128xf32>
    tpu.vector_store %arg8[%c0_18, %c0_19], %32 {strides = array<i32>} : memref<8x128xf32, #tpu.memory_space<vmem>>, vector<8x128xf32>,
    return
  }
  func.func @transform_0(%arg0: i32) -> (i32, i32) {
    %c0_i32 = arith.constant 0 : i32
    %c0_i32_0 = arith.constant 0 : i32
    return %arg0, %c0_i32 : i32, i32
  }
  func.func @transform_1(%arg0: i32) -> (i32, i32) {
    %c0_i32 = arith.constant 0 : i32
    %c0_i32_0 = arith.constant 0 : i32
    %c0_i32_1 = arith.constant 0 : i32
    return %c0_i32, %c0_i32_0 : i32, i32
  }
  func.func @transform_2(%arg0: i32) -> (i32, i32) {
    %c0_i32 = arith.constant 0 : i32
    %c0_i32_0 = arith.constant 0 : i32
    %c0_i32_1 = arith.constant 0 : i32
    return %c0_i32, %c0_i32_0 : i32, i32
  }
  func.func @transform_3(%arg0: i32) -> (i32, i32) {
    %c0_i32 = arith.constant 0 : i32
    %c0_i32_0 = arith.constant 0 : i32
    %c0_i32_1 = arith.constant 0 : i32
    return %c0_i32, %c0_i32_0 : i32, i32
  }
  func.func @transform_4(%arg0: i32) -> (i32, i32) {
    %c0_i32 = arith.constant 0 : i32
    %c0_i32_0 = arith.constant 0 : i32
    %c0_i32_1 = arith.constant 0 : i32
    return %c0_i32, %c0_i32_0 : i32, i32
  }
  func.func @transform_5(%arg0: i32) -> (i32, i32) {
    %c0_i32 = arith.constant 0 : i32
    %c0_i32_0 = arith.constant 0 : i32
    %c0_i32_1 = arith.constant 0 : i32
    return %c0_i32, %c0_i32_0 : i32, i32
  }
  func.func @transform_6(%arg0: i32) -> (i32, i32) {
    %c0_i32 = arith.constant 0 : i32
    %c0_i32_0 = arith.constant 0 : i32
    %c0_i32_1 = arith.constant 0 : i32
    return %c0_i32, %c0_i32_0 : i32, i32
  }
  func.func @transform_7(%arg0: i32) -> (i32, i32) {
    %c0_i32 = arith.constant 0 : i32
    %c0_i32_0 = arith.constant 0 : i32
    return %arg0, %c0_i32 : i32, i32
  }
}

</mosaic_0001>

<llo_original>
// kernel: tpu_custom_call.1
$region0: #{tpu_custom_call.1}
  #allocation0 [shape = 'u32[]', space=smem, size = 0x4, offset = 0x4, fixed_abs, tag = 'smem constant byte address 0x4 - core index']
  #allocation1 [shape = 'u32[144,128]{1,0:T(1,128)}', space=vmem, size = 0x12000, scoped, tag = 'internal scratch']
  %s0 = inlined_call_operand.hbm [shape: s32[8,16], index: 0, kind: input, shape index: {}]
  %s1 = inlined_call_operand.hbm [shape: f32[16,512], index: 1, kind: input, shape index: {}]
  %s2 = inlined_call_operand.vmem [shape: f32[1,512], index: 2, kind: input, shape index: {}]
  %s3 = inlined_call_operand.hbm [shape: bf16[512,128], index: 3, kind: input, shape index: {}]
  %s4 = inlined_call_operand.vmem [shape: f32[1,128], index: 4, kind: input, shape index: {}]
  %s5 = inlined_call_operand.hbm [shape: bf16[128,128], index: 5, kind: input, shape index: {}]
  %s6 = inlined_call_operand.vmem [shape: f32[1,128], index: 6, kind: input, shape index: {}]
  %s7 = inlined_call_operand.hbm [shape: f32[8,128], index: 7, kind: output, shape index: {}]
  %s8 = sld [smem:[#allocation0]]
  $region54: #{tpu_custom_call.1} parent=0
    _
  %s10 = ssub.s32 1, %s8
  %s11 = scalar_select 0, %s10, %s8
  $region1: #{tpu_custom_call.1} parent=0
    #allocation2 [shape = 'u8[4096]{0}', space=vmem, size = 0x1000, scoped, tag = 'input window, operand 0, single buffered']
    #allocation3 [shape = 's32[1]{0}', space=sflag, size = 0x4, scoped, tag = 'scoped memory for tpu_custom_call.1']
    #allocation4 [shape = 's32[1]{0}', space=sflag, size = 0x4, scoped, tag = 'scoped memory for tpu_custom_call.1']
    #allocation5 [shape = 'u8[32768]{0}', space=vmem, size = 0x8000, scoped, tag = 'input window, operand 1, single buffered']
    #allocation6 [shape = 's32[1]{0}', space=sflag, size = 0x4, scoped, tag = 'scoped memory for tpu_custom_call.1']
    #allocation7 [shape = 'u8[131072]{0}', space=vmem, size = 0x20000, scoped, tag = 'input window, operand 3, single buffered']
    #allocation8 [shape = 'u8[32768]{0}', space=vmem, size = 0x8000, scoped, tag = 'input window, operand 5, single buffered']
    #allocation9 [shape = 's32[1]{0}', space=sflag, size = 0x4, scoped, tag = 'scoped memory for tpu_custom_call.1']
    #allocation10 [shape = 'u8[4096]{0}', space=vmem, size = 0x1000, scoped, tag = 'output window, operand 0, single buffered']
    %12 = vsyncpa [#allocation3], 0
    %13 = vsyncpa [#allocation6], 0
    %14 = vsyncpa [#allocation9], 0
    %15 = vsyncpa [#allocation4], 0
    // Predicated region
    $region2: #{tpu_custom_call.1} parent=1 // pred_check
      _
    $region3: #{tpu_custom_call.1} parent=1 // pred_check_branch
      %17 = sbr.rel (0) target = $region5
    $region4: #{tpu_custom_call.1} parent=1 // pred_region
      %s19 = ssub.s32 128, 128
      %20 = vsyncadd [#allocation3], %s19
      %s22 = sshll.u32 [#allocation2], 4
      %s23 = int_to_ptr.vmem [resolvable:$true] %s22
      %25 = dma.hbm_to_vmem [thread:$0]  %s0, 128, %s23, [#allocation3]
    $region5: #{tpu_custom_call.1} parent=1 // pred_fallthru
      _
    // Predicated region
    $region6: #{tpu_custom_call.1} parent=1 // pred_check
      _
    $region7: #{tpu_custom_call.1} parent=1 // pred_check_branch
      %27 = sbr.rel (0) target = $region9
    $region8: #{tpu_custom_call.1} parent=1 // pred_region
      %s29 = ssub.s32 1024, 1024
      %30 = vsyncadd [#allocation6], %s29
      %s31 = sshll.u32 [#allocation5], 4
      %s32 = int_to_ptr.vmem [resolvable:$true] %s31
      %37 = dma.hbm_to_vmem [thread:$0]  %s1, 1024, %s32, [#allocation6], 512, 512, 32
    $region9: #{tpu_custom_call.1} parent=1 // pred_fallthru
      _
    // Predicated region
    $region10: #{tpu_custom_call.1} parent=1 // pred_check
      _
    $region11: #{tpu_custom_call.1} parent=1 // pred_check_branch
      %39 = sbr.rel (0) target = $region13
    $region12: #{tpu_custom_call.1} parent=1 // pred_region
      _
    $region13: #{tpu_custom_call.1} parent=1 // pred_fallthru
      _
    // Predicated region
    $region14: #{tpu_custom_call.1} parent=1 // pred_check
      _
    $region15: #{tpu_custom_call.1} parent=1 // pred_check_branch
      %41 = sbr.rel (0) target = $region17
    $region16: #{tpu_custom_call.1} parent=1 // pred_region
      %s43 = ssub.s32 4096, 4096
      %44 = vsyncadd [#allocation6], %s43
      %s45 = sshll.u32 [#allocation7], 4
      %s46 = int_to_ptr.vmem [resolvable:$true] %s45
      %51 = dma.hbm_to_vmem [thread:$0]  %s3, 4096, %s46, [#allocation6], 64, 64, 4
    $region17: #{tpu_custom_call.1} parent=1 // pred_fallthru
      _
    // Predicated region
    $region18: #{tpu_custom_call.1} parent=1 // pred_check
      _
    $region19: #{tpu_custom_call.1} parent=1 // pred_check_branch
      %53 = sbr.rel (0) target = $region21
    $region20: #{tpu_custom_call.1} parent=1 // pred_region
      _
    $region21: #{tpu_custom_call.1} parent=1 // pred_fallthru
      _
    // Predicated region
    $region22: #{tpu_custom_call.1} parent=1 // pred_check
      _
    $region23: #{tpu_custom_call.1} parent=1 // pred_check_branch
      %55 = sbr.rel (0) target = $region25
    $region24: #{tpu_custom_call.1} parent=1 // pred_region
      %s57 = ssub.s32 1024, 1024
      %58 = vsyncadd [#allocation9], %s57
      %s59 = sshll.u32 [#allocation8], 4
      %s60 = int_to_ptr.vmem [resolvable:$true] %s59
      %65 = dma.hbm_to_vmem [thread:$0]  %s5, 1024, %s60, [#allocation9], 64, 64, 4
    $region25: #{tpu_custom_call.1} parent=1 // pred_fallthru
      _
    // Predicated region
    $region26: #{tpu_custom_call.1} parent=1 // pred_check
      _
    $region27: #{tpu_custom_call.1} parent=1 // pred_check_branch
      %67 = sbr.rel (0) target = $region29
    $region28: #{tpu_custom_call.1} parent=1 // pred_region
      _
    $region29: #{tpu_custom_call.1} parent=1 // pred_fallthru
      _
    // Predicated region
    $region30: #{tpu_custom_call.1} parent=1 // pred_check
      _
    $region31: #{tpu_custom_call.1} parent=1 // pred_check_branch
      %69 = sbr.rel (0) target = $region33
    $region32: #{tpu_custom_call.1} parent=1 // pred_region
      %70 = dma.done [#allocation3], 128
    $region33: #{tpu_custom_call.1} parent=1 // pred_fallthru
      _
    // Predicated region
    $region34: #{tpu_custom_call.1} parent=1 // pred_check
      _
    $region35: #{tpu_custom_call.1} parent=1 // pred_check_branch
      %72 = sbr.rel (0) target = $region37
    $region36: #{tpu_custom_call.1} parent=1 // pred_region
      %73 = dma.done [#allocation6], 1024
    $region37: #{tpu_custom_call.1} parent=1 // pred_fallthru
      _
    // Predicated region
    $region38: #{tpu_custom_call.1} parent=1 // pred_check
      _
    $region39: #{tpu_custom_call.1} parent=1 // pred_check_branch
      %75 = sbr.rel (0) target = $region41
    $region40: #{tpu_custom_call.1} parent=1 // pred_region
      %76 = dma.done [#allocation6], 4096
    $region41: #{tpu_custom_call.1} parent=1 // pred_fallthru
      _
    // Predicated region
    $region42: #{tpu_custom_call.1} parent=1 // pred_check
      _
    $region43: #{tpu_custom_call.1} parent=1 // pred_check_branch
      %78 = sbr.rel (0) target = $region45
    $region44: #{tpu_custom_call.1} parent=1 // pred_region
      %79 = dma.done [#allocation9], 1024
    $region45: #{tpu_custom_call.1} parent=1 // pred_fallthru
      _
    %v81 = vld [vmem:[#allocation2] sm:$0xff]
    %v82 = vcvt.s32.f32 %v81
    %v83 = vld [vmem:[#allocation5] sm:$0xff]
    %v84 = vld [vmem:[#allocation5 + $0x8] sm:$0xff]
    %v85 = vld [vmem:[#allocation5 + $0x10] sm:$0xff]
    %v86 = vld [vmem:[#allocation5 + $0x18] sm:$0xff]
    %v87 = vld [vmem:[#allocation5 + $0x20] sm:$0xff]
    %v88 = vld [vmem:[#allocation5 + $0x28] sm:$0xff]
    %v89 = vld [vmem:[#allocation5 + $0x30] sm:$0xff]
    %v90 = vld [vmem:[#allocation5 + $0x38] sm:$0xff]
    %vm91 = vcmask 130048
    %v93 = vsel %vm91, %v82, 0
    %95 = vmatprep.subr.mxu0 %v84
    %96 = vmatpush1.msra.mxu0 %v83
    %97 = vmatprep.subr.mxu0 %v88
    %98 = vmatpush1.msra.mxu0 %v87
    %99 = vmatprep.subr.mxu0 0.0
    %100 = vmatpush1.msra.mxu0 0.0
    %101 = vmatprep.subr.mxu0 0.0
    %102 = vmatpush1.msra.mxu0 0.0
    %103 = vmatprep.subr.mxu0 0.0
    %104 = vmatpush1.msra.mxu0 0.0
    %105 = vmatprep.subr.mxu0 0.0
    %106 = vmatpush1.msra.mxu0 0.0
    %107 = vmatprep.subr.mxu0 0.0
    %108 = vmatpush1.msra.mxu0 0.0
    %109 = vmatprep.subr.mxu0 0.0
    %110 = vmatpush1.msra.mxu0 0.0
    %111 = vmatprep.subr.mxu0 0.0
    %112 = vmatpush1.msra.mxu0 0.0
    %113 = vmatprep.subr.mxu0 0.0
    %114 = vmatpush1.msra.mxu0 0.0
    %115 = vmatprep.subr.mxu0 0.0
    %116 = vmatpush1.msra.mxu0 0.0
    %117 = vmatprep.subr.mxu0 0.0
    %118 = vmatpush1.msra.mxu0 0.0
    %119 = vmatprep.subr.mxu0 0.0
    %120 = vmatpush1.msra.mxu0 0.0
    %121 = vmatprep.subr.mxu0 0.0
    %122 = vmatpush1.msra.mxu0 0.0
    %123 = vmatprep.subr.mxu0 0.0
    %124 = vmatpush1.msra.mxu0 0.0
    %125 = vmatprep.subr.mxu0 0.0
    %126 = vmatpush1.msra.mxu0 0.0
    %127 = vmatprep.subr.mxu0 0.0
    %128 = vmatpush1.msra.mxu0 0.0
    %129 = vmatprep.subr.mxu0 0.0
    %130 = vmatpush1.msra.mxu0 0.0
    %131 = vmatprep.subr.mxu0 0.0
    %132 = vmatpush1.msra.mxu0 0.0
    %133 = vmatprep.subr.mxu0 0.0
    %134 = vmatpush1.msra.mxu0 0.0
    %135 = vmatprep.subr.mxu0 0.0
    %136 = vmatpush1.msra.mxu0 0.0
    %137 = vmatprep.subr.mxu0 0.0
    %138 = vmatpush1.msra.mxu0 0.0
    %139 = vmatprep.subr.mxu0 0.0
    %140 = vmatpush1.msra.mxu0 0.0
    %141 = vmatprep.subr.mxu0 0.0
    %142 = vmatpush1.msra.mxu0 0.0
    %143 = vmatprep.subr.mxu0 0.0
    %144 = vmatpush1.msra.mxu0 0.0
    %145 = vmatprep.subr.mxu0 0.0
    %146 = vmatpush1.msra.mxu0 0.0
    %147 = vmatprep.subr.mxu0 0.0
    %148 = vmatpush1.msra.mxu0 0.0
    %149 = vmatprep.subr.mxu0 0.0
    %150 = vmatpush1.msra.mxu0 0.0
    %151 = vmatprep.subr.mxu0 0.0
    %152 = vmatpush1.msra.mxu0 0.0
    %153 = vmatprep.subr.mxu0 0.0
    %154 = vmatpush1.msra.mxu0 0.0
    %155 = vmatprep.subr.mxu0 0.0
    %156 = vmatpush1.msra.mxu0 0.0
    %157 = vmatprep.subr.mxu0 0.0
    %158 = vmatpush1.msra.mxu0 0.0
    %159 = vmatprep.mubr.f32.mxu0 0.0
    %160 = vmatmul.mubr.f32.gmra.mrb[0].mxu0 %v93
    %v161 = vpop.f32.mrb[0].mxu0
    %v162 = vadd.f32 0.0, %v161
    %v163 = vpop.f32.mrb[0].mxu0
    %v164 = vadd.f32 0.0, %v163
    %165 = vdwg.mxu0
    %166 = vmatprep.subr.mxu0 %v86
    %167 = vmatpush1.msra.mxu0 %v85
    %168 = vmatprep.subr.mxu0 %v90
    %169 = vmatpush1.msra.mxu0 %v89
    %170 = vmatprep.subr.mxu0 0.0
    %171 = vmatpush1.msra.mxu0 0.0
    %172 = vmatprep.subr.mxu0 0.0
    %173 = vmatpush1.msra.mxu0 0.0
    %174 = vmatprep.subr.mxu0 0.0
    %175 = vmatpush1.msra.mxu0 0.0
    %176 = vmatprep.subr.mxu0 0.0
    %177 = vmatpush1.msra.mxu0 0.0
    %178 = vmatprep.subr.mxu0 0.0
    %179 = vmatpush1.msra.mxu0 0.0
    %180 = vmatprep.subr.mxu0 0.0
    %181 = vmatpush1.msra.mxu0 0.0
    %182 = vmatprep.subr.mxu0 0.0
    %183 = vmatpush1.msra.mxu0 0.0
    %184 = vmatprep.subr.mxu0 0.0
    %185 = vmatpush1.msra.mxu0 0.0
    %186 = vmatprep.subr.mxu0 0.0
    %187 = vmatpush1.msra.mxu0 0.0
    %188 = vmatprep.subr.mxu0 0.0
    %189 = vmatpush1.msra.mxu0 0.0
    %190 = vmatprep.subr.mxu0 0.0
    %191 = vmatpush1.msra.mxu0 0.0
    %192 = vmatprep.subr.mxu0 0.0
    %193 = vmatpush1.msra.mxu0 0.0
    %194 = vmatprep.subr.mxu0 0.0
    %195 = vmatpush1.msra.mxu0 0.0
    %196 = vmatprep.subr.mxu0 0.0
    %197 = vmatpush1.msra.mxu0 0.0
    %198 = vmatprep.subr.mxu0 0.0
    %199 = vmatpush1.msra.mxu0 0.0
    %200 = vmatprep.subr.mxu0 0.0
    %201 = vmatpush1.msra.mxu0 0.0
    %202 = vmatprep.subr.mxu0 0.0
    %203 = vmatpush1.msra.mxu0 0.0
    %204 = vmatprep.subr.mxu0 0.0
    %205 = vmatpush1.msra.mxu0 0.0
    %206 = vmatprep.subr.mxu0 0.0
    %207 = vmatpush1.msra.mxu0 0.0
    %208 = vmatprep.subr.mxu0 0.0
    %209 = vmatpush1.msra.mxu0 0.0
    %210 = vmatprep.subr.mxu0 0.0
    %211 = vmatpush1.msra.mxu0 0.0
    %212 = vmatprep.subr.mxu0 0.0
    %213 = vmatpush1.msra.mxu0 0.0
    %214 = vmatprep.subr.mxu0 0.0
    %215 = vmatpush1.msra.mxu0 0.0
    %216 = vmatprep.subr.mxu0 0.0
    %217 = vmatpush1.msra.mxu0 0.0
    %218 = vmatprep.subr.mxu0 0.0
    %219 = vmatpush1.msra.mxu0 0.0
    %220 = vmatprep.subr.mxu0 0.0
    %221 = vmatpush1.msra.mxu0 0.0
    %222 = vmatprep.subr.mxu0 0.0
    %223 = vmatpush1.msra.mxu0 0.0
    %224 = vmatprep.subr.mxu0 0.0
    %225 = vmatpush1.msra.mxu0 0.0
    %226 = vmatprep.subr.mxu0 0.0
    %227 = vmatpush1.msra.mxu0 0.0
    %228 = vmatprep.subr.mxu0 0.0
    %229 = vmatpush1.msra.mxu0 0.0
    %230 = vmatprep.mubr.f32.mxu0 0.0
    %231 = vmatmul.mubr.f32.gmra.mrb[0].mxu0 %v93
    %v232 = vpop.f32.mrb[0].mxu0
    %v233 = vadd.f32 0.0, %v232
    %v234 = vpop.f32.mrb[0].mxu0
    %v235 = vadd.f32 0.0, %v234
    %236 = vdwg.mxu0
    %v237 = vld [vmem:[%s2] sm:$0xf]
    %v239 = vlaneseq
    %v240 = vshrl.u32 %v239, 7
    %v241 = vsub.s32 0, %v240
    %v242 = vrot.slane %v237, %v241
    %v243 = vlaneseq
    %v244 = vshrl.u32 %v243, 7
    %v245 = vsub.s32 1, %v244
    %v246 = vrot.slane %v237, %v245
    %v247 = vlaneseq
    %v248 = vshrl.u32 %v247, 7
    %v249 = vsub.s32 2, %v248
    %v250 = vrot.slane %v237, %v249
    %v251 = vlaneseq
    %v252 = vshrl.u32 %v251, 7
    %v253 = vsub.s32 3, %v252
    %v254 = vrot.slane %v237, %v253
    %vm259 = vcmp.eq.f32.partialorder %v162, %v242
    %vm260 = vcmp.eq.f32.partialorder %v164, %v246
    %vm261 = vcmp.eq.f32.partialorder %v233, %v250
    %vm262 = vcmp.eq.f32.partialorder %v235, %v254
    %v263 = vsel %vm259, 1, 0
    %v264 = vsel %vm260, 1, 0
    %v265 = vsel %vm261, 1, 0
    %v266 = vsel %vm262, 1, 0
    %v267 = vcvt.s32.f32 %v263
    %v268 = vcvt.s32.f32 %v264
    %v269 = vcvt.s32.f32 %v265
    %v270 = vcvt.s32.f32 %v266
    %v271 = vpack.c.bf16 %v267, %v267
    %v272 = vpack.c.bf16 %v268, %v268
    %v273 = vpack.c.bf16 %v269, %v269
    %v274 = vpack.c.bf16 %v270, %v270
    %v275 = vld [vmem:[#allocation7] sm:$0xf]
    %v276 = vld [vmem:[#allocation7 + $0x4] sm:$0xf]
    %v277 = vld [vmem:[#allocation7 + $0x8] sm:$0xf]
    %v278 = vld [vmem:[#allocation7 + $0xc] sm:$0xf]
    %v279 = vld [vmem:[#allocation7 + $0x10] sm:$0xf]
    %v280 = vld [vmem:[#allocation7 + $0x14] sm:$0xf]
    %v281 = vld [vmem:[#allocation7 + $0x18] sm:$0xf]
    %v282 = vld [vmem:[#allocation7 + $0x1c] sm:$0xf]
    %v283 = vld [vmem:[#allocation7 + $0x20] sm:$0xf]
    %v284 = vld [vmem:[#allocation7 + $0x24] sm:$0xf]
    %v285 = vld [vmem:[#allocation7 + $0x28] sm:$0xf]
    %v286 = vld [vmem:[#allocation7 + $0x2c] sm:$0xf]
    %v287 = vld [vmem:[#allocation7 + $0x30] sm:$0xf]
    %v288 = vld [vmem:[#allocation7 + $0x34] sm:$0xf]
    %v289 = vld [vmem:[#allocation7 + $0x38] sm:$0xf]
    %v290 = vld [vmem:[#allocation7 + $0x3c] sm:$0xf]
    %v291 = vld [vmem:[#allocation7 + $0x40] sm:$0xf]
    %v292 = vld [vmem:[#allocation7 + $0x44] sm:$0xf]
    %v293 = vld [vmem:[#allocation7 + $0x48] sm:$0xf]
    %v294 = vld [vmem:[#allocation7 + $0x4c] sm:$0xf]
    %v295 = vld [vmem:[#allocation7 + $0x50] sm:$0xf]
    %v296 = vld [vmem:[#allocation7 + $0x54] sm:$0xf]
    %v297 = vld [vmem:[#allocation7 + $0x58] sm:$0xf]
    %v298 = vld [vmem:[#allocation7 + $0x5c] sm:$0xf]
    %v299 = vld [vmem:[#allocation7 + $0x60] sm:$0xf]
    %v300 = vld [vmem:[#allocation7 + $0x64] sm:$0xf]
    %v301 = vld [vmem:[#allocation7 + $0x68] sm:$0xf]
    %v302 = vld [vmem:[#allocation7 + $0x6c] sm:$0xf]
    %v303 = vld [vmem:[#allocation7 + $0x70] sm:$0xf]
    %v304 = vld [vmem:[#allocation7 + $0x74] sm:$0xf]
    %v305 = vld [vmem:[#allocation7 + $0x78] sm:$0xf]
    %v306 = vld [vmem:[#allocation7 + $0x7c] sm:$0xf]
    %v307 = vld [vmem:[#allocation7 + $0x80] sm:$0xf]
    %v308 = vld [vmem:[#allocation7 + $0x84] sm:$0xf]
    %v309 = vld [vmem:[#allocation7 + $0x88] sm:$0xf]
    %v310 = vld [vmem:[#allocation7 + $0x8c] sm:$0xf]
    %v311 = vld [vmem:[#allocation7 + $0x90] sm:$0xf]
    %v312 = vld [vmem:[#allocation7 + $0x94] sm:$0xf]
    %v313 = vld [vmem:[#allocation7 + $0x98] sm:$0xf]
    %v314 = vld [vmem:[#allocation7 + $0x9c] sm:$0xf]
    %v315 = vld [vmem:[#allocation7 + $0xa0] sm:$0xf]
    %v316 = vld [vmem:[#allocation7 + $0xa4] sm:$0xf]
    %v317 = vld [vmem:[#allocation7 + $0xa8] sm:$0xf]
    %v318 = vld [vmem:[#allocation7 + $0xac] sm:$0xf]
    %v319 = vld [vmem:[#allocation7 + $0xb0] sm:$0xf]
    %v320 = vld [vmem:[#allocation7 + $0xb4] sm:$0xf]
    %v321 = vld [vmem:[#allocation7 + $0xb8] sm:$0xf]
    %v322 = vld [vmem:[#allocation7 + $0xbc] sm:$0xf]
    %v323 = vld [vmem:[#allocation7 + $0xc0] sm:$0xf]
    %v324 = vld [vmem:[#allocation7 + $0xc4] sm:$0xf]
    %v325 = vld [vmem:[#allocation7 + $0xc8] sm:$0xf]
    %v326 = vld [vmem:[#allocation7 + $0xcc] sm:$0xf]
    %v327 = vld [vmem:[#allocation7 + $0xd0] sm:$0xf]
    %v328 = vld [vmem:[#allocation7 + $0xd4] sm:$0xf]
    %v329 = vld [vmem:[#allocation7 + $0xd8] sm:$0xf]
    %v330 = vld [vmem:[#allocation7 + $0xdc] sm:$0xf]
    %v331 = vld [vmem:[#allocation7 + $0xe0] sm:$0xf]
    %v332 = vld [vmem:[#allocation7 + $0xe4] sm:$0xf]
    %v333 = vld [vmem:[#allocation7 + $0xe8] sm:$0xf]
    %v334 = vld [vmem:[#allocation7 + $0xec] sm:$0xf]
    %v335 = vld [vmem:[#allocation7 + $0xf0] sm:$0xf]
    %v336 = vld [vmem:[#allocation7 + $0xf4] sm:$0xf]
    %v337 = vld [vmem:[#allocation7 + $0xf8] sm:$0xf]
    %v338 = vld [vmem:[#allocation7 + $0xfc] sm:$0xf]
    %v339 = vld [vmem:[%s4] sm:$0x1]
    %v341 = vlaneseq
    %v342 = vshrl.u32 %v341, 7
    %v343 = vsub.s32 0, %v342
    %v344 = vrot.slane %v339, %v343
    %v410 = vunpack.c.l.b16 %v275
    %v411 = vunpack.c.l.b16 %v276
    %v412 = vunpack.c.l.b16 %v277
    %v413 = vunpack.c.l.b16 %v278
    %v414 = vunpack.c.l.b16 %v279
    %v415 = vunpack.c.l.b16 %v280
    %v416 = vunpack.c.l.b16 %v281
    %v417 = vunpack.c.l.b16 %v282
    %v418 = vunpack.c.l.b16 %v283
    %v419 = vunpack.c.l.b16 %v284
    %v420 = vunpack.c.l.b16 %v285
    %v421 = vunpack.c.l.b16 %v286
    %v422 = vunpack.c.l.b16 %v287
    %v423 = vunpack.c.l.b16 %v288
    %v424 = vunpack.c.l.b16 %v289
    %v425 = vunpack.c.l.b16 %v290
    %v426 = vunpack.c.l.b16 %v291
    %v427 = vunpack.c.l.b16 %v292
    %v428 = vunpack.c.l.b16 %v293
    %v429 = vunpack.c.l.b16 %v294
    %v430 = vunpack.c.l.b16 %v295
    %v431 = vunpack.c.l.b16 %v296
    %v432 = vunpack.c.l.b16 %v297
    %v433 = vunpack.c.l.b16 %v298
    %v434 = vunpack.c.l.b16 %v299
    %v435 = vunpack.c.l.b16 %v300
    %v436 = vunpack.c.l.b16 %v301
    %v437 = vunpack.c.l.b16 %v302
    %v438 = vunpack.c.l.b16 %v303
    %v439 = vunpack.c.l.b16 %v304
    %v440 = vunpack.c.l.b16 %v305
    %v441 = vunpack.c.l.b16 %v306
    %v442 = vunpack.c.l.b16 %v307
    %v443 = vunpack.c.l.b16 %v308
    %v444 = vunpack.c.l.b16 %v309
    %v445 = vunpack.c.l.b16 %v310
    %v446 = vunpack.c.l.b16 %v311
    %v447 = vunpack.c.l.b16 %v312
    %v448 = vunpack.c.l.b16 %v313
    %v449 = vunpack.c.l.b16 %v314
    %v450 = vunpack.c.l.b16 %v315
    %v451 = vunpack.c.l.b16 %v316
    %v452 = vunpack.c.l.b16 %v317
    %v453 = vunpack.c.l.b16 %v318
    %v454 = vunpack.c.l.b16 %v319
    %v455 = vunpack.c.l.b16 %v320
    %v456 = vunpack.c.l.b16 %v321
    %v457 = vunpack.c.l.b16 %v322
    %v458 = vunpack.c.l.b16 %v323
    %v459 = vunpack.c.l.b16 %v324
    %v460 = vunpack.c.l.b16 %v325
    %v461 = vunpack.c.l.b16 %v326
    %v462 = vunpack.c.l.b16 %v327
    %v463 = vunpack.c.l.b16 %v328
    %v464 = vunpack.c.l.b16 %v329
    %v465 = vunpack.c.l.b16 %v330
    %v466 = vunpack.c.l.b16 %v331
    %v467 = vunpack.c.l.b16 %v332
    %v468 = vunpack.c.l.b16 %v333
    %v469 = vunpack.c.l.b16 %v334
    %v470 = vunpack.c.l.b16 %v335
    %v471 = vunpack.c.l.b16 %v336
    %v472 = vunpack.c.l.b16 %v337
    %v473 = vunpack.c.l.b16 %v338
    %v474 = vpack.c.b16 %v411, %v410
    %v475 = vpack.c.b16 %v413, %v412
    %v476 = vpack.c.b16 %v415, %v414
    %v477 = vpack.c.b16 %v417, %v416
    %v478 = vpack.c.b16 %v419, %v418
    %v479 = vpack.c.b16 %v421, %v420
    %v480 = vpack.c.b16 %v423, %v422
    %v481 = vpack.c.b16 %v425, %v424
    %v482 = vpack.c.b16 %v427, %v426
    %v483 = vpack.c.b16 %v429, %v428
    %v484 = vpack.c.b16 %v431, %v430
    %v485 = vpack.c.b16 %v433, %v432
    %v486 = vpack.c.b16 %v435, %v434
    %v487 = vpack.c.b16 %v437, %v436
    %v488 = vpack.c.b16 %v439, %v438
    %v489 = vpack.c.b16 %v441, %v440
    %v490 = vpack.c.b16 %v443, %v442
    %v491 = vpack.c.b16 %v445, %v444
    %v492 = vpack.c.b16 %v447, %v446
    %v493 = vpack.c.b16 %v449, %v448
    %v494 = vpack.c.b16 %v451, %v450
    %v495 = vpack.c.b16 %v453, %v452
    %v496 = vpack.c.b16 %v455, %v454
    %v497 = vpack.c.b16 %v457, %v456
    %v498 = vpack.c.b16 %v459, %v458
    %v499 = vpack.c.b16 %v461, %v460
    %v500 = vpack.c.b16 %v463, %v462
    %v501 = vpack.c.b16 %v465, %v464
    %v502 = vpack.c.b16 %v467, %v466
    %v503 = vpack.c.b16 %v469, %v468
    %v504 = vpack.c.b16 %v471, %v470
    %v505 = vpack.c.b16 %v473, %v472
    %538 = vmatprep.subr.bf16.mxu0 0
    %539 = vmatpush1.bf16.msra.mxu0 %v474
    %540 = vmatprep.subr.bf16.mxu0 0
    %541 = vmatpush1.bf16.msra.mxu0 %v475
    %542 = vmatprep.subr.bf16.mxu0 0
    %543 = vmatpush1.bf16.msra.mxu0 %v476
    %544 = vmatprep.subr.bf16.mxu0 0
    %545 = vmatpush1.bf16.msra.mxu0 %v477
    %546 = vmatprep.subr.bf16.mxu0 0
    %547 = vmatpush1.bf16.msra.mxu0 %v478
    %548 = vmatprep.subr.bf16.mxu0 0
    %549 = vmatpush1.bf16.msra.mxu0 %v479
    %550 = vmatprep.subr.bf16.mxu0 0
    %551 = vmatpush1.bf16.msra.mxu0 %v480
    %552 = vmatprep.subr.bf16.mxu0 0
    %553 = vmatpush1.bf16.msra.mxu0 %v481
    %554 = vmatprep.subr.bf16.mxu0 0
    %555 = vmatpush1.bf16.msra.mxu0 %v482
    %556 = vmatprep.subr.bf16.mxu0 0
    %557 = vmatpush1.bf16.msra.mxu0 %v483
    %558 = vmatprep.subr.bf16.mxu0 0
    %559 = vmatpush1.bf16.msra.mxu0 %v484
    %560 = vmatprep.subr.bf16.mxu0 0
    %561 = vmatpush1.bf16.msra.mxu0 %v485
    %562 = vmatprep.subr.bf16.mxu0 0
    %563 = vmatpush1.bf16.msra.mxu0 %v486
    %564 = vmatprep.subr.bf16.mxu0 0
    %565 = vmatpush1.bf16.msra.mxu0 %v487
    %566 = vmatprep.subr.bf16.mxu0 0
    %567 = vmatpush1.bf16.msra.mxu0 %v488
    %568 = vmatprep.subr.bf16.mxu0 0
    %569 = vmatpush1.bf16.msra.mxu0 %v489
    %570 = vmatprep.mubr.bf16.mxu0 %v272
    %571 = vmatmul.mubr.bf16.gmra.mrb[0].mxu0 %v271
    %v572 = vpop.f32.mrb[0].mxu0
    %v573 = vadd.f32 %v344, %v572
    %v574 = vpop.f32.mrb[0].mxu0
    %v575 = vpop.f32.mrb[0].mxu0
    %v576 = vpop.f32.mrb[0].mxu0
    %577 = vdwg.mxu0
    %578 = vmatprep.subr.bf16.mxu0 0
    %579 = vmatpush1.bf16.msra.mxu0 %v490
    %580 = vmatprep.subr.bf16.mxu0 0
    %581 = vmatpush1.bf16.msra.mxu0 %v491
    %582 = vmatprep.subr.bf16.mxu0 0
    %583 = vmatpush1.bf16.msra.mxu0 %v492
    %584 = vmatprep.subr.bf16.mxu0 0
    %585 = vmatpush1.bf16.msra.mxu0 %v493
    %586 = vmatprep.subr.bf16.mxu0 0
    %587 = vmatpush1.bf16.msra.mxu0 %v494
    %588 = vmatprep.subr.bf16.mxu0 0
    %589 = vmatpush1.bf16.msra.mxu0 %v495
    %590 = vmatprep.subr.bf16.mxu0 0
    %591 = vmatpush1.bf16.msra.mxu0 %v496
    %592 = vmatprep.subr.bf16.mxu0 0
    %593 = vmatpush1.bf16.msra.mxu0 %v497
    %594 = vmatprep.subr.bf16.mxu0 0
    %595 = vmatpush1.bf16.msra.mxu0 %v498
    %596 = vmatprep.subr.bf16.mxu0 0
    %597 = vmatpush1.bf16.msra.mxu0 %v499
    %598 = vmatprep.subr.bf16.mxu0 0
    %599 = vmatpush1.bf16.msra.mxu0 %v500
    %600 = vmatprep.subr.bf16.mxu0 0
    %601 = vmatpush1.bf16.msra.mxu0 %v501
    %602 = vmatprep.subr.bf16.mxu0 0
    %603 = vmatpush1.bf16.msra.mxu0 %v502
    %604 = vmatprep.subr.bf16.mxu0 0
    %605 = vmatpush1.bf16.msra.mxu0 %v503
    %606 = vmatprep.subr.bf16.mxu0 0
    %607 = vmatpush1.bf16.msra.mxu0 %v504
    %608 = vmatprep.subr.bf16.mxu0 0
    %609 = vmatpush1.bf16.msra.mxu0 %v505
    %610 = vmatprep.mubr.bf16.mxu0 %v274
    %611 = vmatmul.mubr.bf16.gmra.mrb[0].mxu0 %v273
    %v612 = vpop.f32.mrb[0].mxu0
    %v613 = vadd.f32 %v573, %v612
    %v614 = vpop.f32.mrb[0].mxu0
    %v615 = vpop.f32.mrb[0].mxu0
    %v616 = vpop.f32.mrb[0].mxu0
    %617 = vdwg.mxu0
    %v618 = vmax.f32 %v613, 0.0
    %v619 = vpack.c.bf16 %v618, %v618
    %v620 = vld [vmem:[#allocation8] sm:$0xf]
    %v621 = vld [vmem:[#allocation8 + $0x4] sm:$0xf]
    %v622 = vld [vmem:[#allocation8 + $0x8] sm:$0xf]
    %v623 = vld [vmem:[#allocation8 + $0xc] sm:$0xf]
    %v624 = vld [vmem:[#allocation8 + $0x10] sm:$0xf]
    %v625 = vld [vmem:[#allocation8 + $0x14] sm:$0xf]
    %v626 = vld [vmem:[#allocation8 + $0x18] sm:$0xf]
    %v627 = vld [vmem:[#allocation8 + $0x1c] sm:$0xf]
    %v628 = vld [vmem:[#allocation8 + $0x20] sm:$0xf]
    %v629 = vld [vmem:[#allocation8 + $0x24] sm:$0xf]
    %v630 = vld [vmem:[#allocation8 + $0x28] sm:$0xf]
    %v631 = vld [vmem:[#allocation8 + $0x2c] sm:$0xf]
    %v632 = vld [vmem:[#allocation8 + $0x30] sm:$0xf]
    %v633 = vld [vmem:[#allocation8 + $0x34] sm:$0xf]
    %v634 = vld [vmem:[#allocation8 + $0x38] sm:$0xf]
    %v635 = vld [vmem:[#allocation8 + $0x3c] sm:$0xf]
    %v636 = vld [vmem:[%s6] sm:$0x1]
    %v638 = vlaneseq
    %v639 = vshrl.u32 %v638, 7
    %v640 = vsub.s32 0, %v639
    %v641 = vrot.slane %v636, %v640
    %v659 = vunpack.c.l.b16 %v620
    %v660 = vunpack.c.l.b16 %v621
    %v661 = vunpack.c.l.b16 %v622
    %v662 = vunpack.c.l.b16 %v623
    %v663 = vunpack.c.l.b16 %v624
    %v664 = vunpack.c.l.b16 %v625
    %v665 = vunpack.c.l.b16 %v626
    %v666 = vunpack.c.l.b16 %v627
    %v667 = vunpack.c.l.b16 %v628
    %v668 = vunpack.c.l.b16 %v629
    %v669 = vunpack.c.l.b16 %v630
    %v670 = vunpack.c.l.b16 %v631
    %v671 = vunpack.c.l.b16 %v632
    %v672 = vunpack.c.l.b16 %v633
    %v673 = vunpack.c.l.b16 %v634
    %v674 = vunpack.c.l.b16 %v635
    %v675 = vpack.c.b16 %v660, %v659
    %v676 = vpack.c.b16 %v662, %v661
    %v677 = vpack.c.b16 %v664, %v663
    %v678 = vpack.c.b16 %v666, %v665
    %v679 = vpack.c.b16 %v668, %v667
    %v680 = vpack.c.b16 %v670, %v669
    %v681 = vpack.c.b16 %v672, %v671
    %v682 = vpack.c.b16 %v674, %v673
    %691 = vmatprep.subr.bf16.mxu0 0
    %692 = vmatpush1.bf16.msra.mxu0 %v675
    %693 = vmatprep.subr.bf16.mxu0 0
    %694 = vmatpush1.bf16.msra.mxu0 %v676
    %695 = vmatprep.subr.bf16.mxu0 0
    %696 = vmatpush1.bf16.msra.mxu0 %v677
    %697 = vmatprep.subr.bf16.mxu0 0
    %698 = vmatpush1.bf16.msra.mxu0 %v678
    %699 = vmatprep.subr.bf16.mxu0 0
    %700 = vmatpush1.bf16.msra.mxu0 %v679
    %701 = vmatprep.subr.bf16.mxu0 0
    %702 = vmatpush1.bf16.msra.mxu0 %v680
    %703 = vmatprep.subr.bf16.mxu0 0
    %704 = vmatpush1.bf16.msra.mxu0 %v681
    %705 = vmatprep.subr.bf16.mxu0 0
    %706 = vmatpush1.bf16.msra.mxu0 %v682
    %707 = vmatprep.subr.bf16.mxu0 0
    %708 = vmatpush1.bf16.msra.mxu0 0
    %709 = vmatprep.subr.bf16.mxu0 0
    %710 = vmatpush1.bf16.msra.mxu0 0
    %711 = vmatprep.subr.bf16.mxu0 0
    %712 = vmatpush1.bf16.msra.mxu0 0
    %713 = vmatprep.subr.bf16.mxu0 0
    %714 = vmatpush1.bf16.msra.mxu0 0
    %715 = vmatprep.subr.bf16.mxu0 0
    %716 = vmatpush1.bf16.msra.mxu0 0
    %717 = vmatprep.subr.bf16.mxu0 0
    %718 = vmatpush1.bf16.msra.mxu0 0
    %719 = vmatprep.subr.bf16.mxu0 0
    %720 = vmatpush1.bf16.msra.mxu0 0
    %721 = vmatprep.subr.bf16.mxu0 0
    %722 = vmatpush1.bf16.msra.mxu0 0
    %723 = vmatprep.mubr.bf16.mxu0 0
    %724 = vmatmul.mubr.bf16.gmra.mrb[0].mxu0 %v619
    %v725 = vpop.f32.mrb[0].mxu0
    %v726 = vadd.f32 %v641, %v725
    %v727 = vpop.f32.mrb[0].mxu0
    %v728 = vpop.f32.mrb[0].mxu0
    %v729 = vpop.f32.mrb[0].mxu0
    %730 = vdwg.mxu0
    %731 = vmax.xlane.f32.xlu0 %v726
    %v732 = vpop.xlane.xlu0 %731
    %v733 = vsub.f32 %v726, %v732
    %v734 = vmul.f32 %v733, 1.442695
    %v735 = vpow.pop %v734
    %736 = vadd.xlane.f32.xlu0 %v735
    %v737 = vpop.xlane.xlu0 %736
    %v738 = vrcp.pop %v737
    %v739 = vmul.f32 %v735, %v738
    %740 = vst [vmem:[#allocation10] sm:$0xff] %v739
    // Predicated region
    $region46: #{tpu_custom_call.1} parent=1 // pred_check
      _
    $region47: #{tpu_custom_call.1} parent=1 // pred_check_branch
      %742 = sbr.rel (0) target = $region49
    $region48: #{tpu_custom_call.1} parent=1 // pred_region
      %s744 = ssub.s32 128, 128
      %745 = vsyncadd [#allocation4], %s744
      %s747 = sshll.u32 [#allocation10], 4
      %s748 = int_to_ptr.vmem [resolvable:$true] %s747
      %750 = dma.vmem_to_hbm [thread:$0]  %s748, 128, %s7, [#allocation4]
    $region49: #{tpu_custom_call.1} parent=1 // pred_fallthru
      _
    // Predicated region
    $region50: #{tpu_custom_call.1} parent=1 // pred_check
      _
    $region51: #{tpu_custom_call.1} parent=1 // pred_check_branch
      %752 = sbr.rel (0) target = $region53
    $region52: #{tpu_custom_call.1} parent=1 // pred_region
      %753 = dma.done [#allocation4], 128
    $region53: #{tpu_custom_call.1} parent=1 // pred_fallthru
      _
    %754 = vsyncpa [#allocation3], 1
    %755 = vsyncpa [#allocation6], 1
    %756 = vsyncpa [#allocation9], 1
    %757 = vsyncpa [#allocation4], 1

</llo_original>
